<compile_context>
chip_gen: v6e
topology: v6e:2x2x1
jax: 0.10.0
libtpu: 0.0.40
codegen_flags: <defaults>
</compile_context>

<pallas_src>
import jax
import jax.numpy as jnp
import numpy as np
from jax.experimental import pallas as pl
from jax.experimental.pallas import tpu as pltpu


def _ca_block_kernel(x_ref, pool_ref, w1s_ref, wh_ref, ww_ref,
                     eh_ref, ew_ref, bias_ref, out_ref):
    # x_ref block: (Nb, C, H*W)  -- lane-dense last dim.
    nb, C, HW = x_ref.shape
    H = eh_ref.shape[0]

    x = x_ref[...]                                     # (Nb, C, HW) f32
    x2 = x.reshape(nb * C, HW)                         # collapse leading dims (minor dim unchanged)

    # --- fused coordinate pooling: one MXU matmul for both branches ---
    # pooled[:, :H]  = mean over W  (the "x_h" branch)
    # pooled[:, H:]  = mean over H  (the "x_w" branch)
    pooled = jnp.dot(x2, pool_ref[...],
                     preferred_element_type=jnp.float32)   # (Nb*C, H+W)

    bias = bias_ref[...]                               # (Cr, 1) folded BN bias
    w1s = w1s_ref[...]                                 # (Cr, C) conv_1x1 with BN scale folded in
    wh = wh_ref[...]                                   # (C, Cr)
    ww = ww_ref[...]                                   # (C, Cr)
    e_h = eh_ref[...]                                  # (H, HW) 0/1 expansion (repeat along W)
    e_w = ew_ref[...]                                  # (W, HW) 0/1 expansion (tile along H)

    # Per-image channel mixing (Nb is small; static Python unroll).
    for n in range(nb):
        p_n = pooled[n * C:(n + 1) * C, :]             # (C, H+W), sublane-aligned static slice

        # shared 1x1 conv (BN scale pre-folded) + bias + ReLU
        y = jnp.dot(w1s, p_n, preferred_element_type=jnp.float32)   # (Cr, H+W)
        a = jnp.maximum(y + bias, 0.0)                 # (Cr, H+W)

        a_h = a[:, :H]                                 # (Cr, H)
        a_w = a[:, H:]                                 # (Cr, W)

        # F_h / F_w 1x1 convs + sigmoid
        s_h = jax.nn.sigmoid(
            jnp.dot(wh, a_h, preferred_element_type=jnp.float32))   # (C, H)
        s_w = jax.nn.sigmoid(
            jnp.dot(ww, a_w, preferred_element_type=jnp.float32))   # (C, W)

        # Expand gates back to the lane-dense (C, H*W) slab via 0/1 matmuls.
        g_h = jnp.dot(s_h, e_h, preferred_element_type=jnp.float32)  # (C, HW), g_h[c, h*W+w] = s_h[c, h]
        g_w = jnp.dot(s_w, e_w, preferred_element_type=jnp.float32)  # (C, HW), g_w[c, h*W+w] = s_w[c, w]

        out_ref[n] = x[n] * g_h * g_w                  # lane-dense (C, HW) store


def _pick_block_batch(n_batch, max_nb=8):
    """Images per grid step: amortize per-step overhead, but keep >= 2 grid
    steps when possible so both v7x TensorCores get work."""
    best = 1
    for nb in range(1, min(max_nb, n_batch) + 1):
        if n_batch % nb == 0 and n_batch // nb >= 2:
            best = nb
    return best


def ca_block(x, w1, wh, ww, bn_gamma, bn_beta, bn_mean, bn_var, eps=1e-5):
    """x: (N, C, H, W) f32. Returns (N, C, H, W) f32 (eval-mode BN)."""
    N, C, H, W = x.shape
    Cr = w1.shape[0]
    HW = H * W
    L = H + W

    # Fold eval-mode BatchNorm: scale goes into the conv_1x1 weight, bias stays.
    inv_std = 1.0 / jnp.sqrt(bn_var.astype(jnp.float32) + eps)
    scale = bn_gamma.astype(jnp.float32) * inv_std                            # (Cr,)
    w1s = scale[:, None] * w1.astype(jnp.float32)                             # (Cr, C)
    bias = (bn_beta.astype(jnp.float32)
            - bn_mean.astype(jnp.float32) * scale).reshape(Cr, 1)             # (Cr, 1)

    # Constant pooling / expansion matrices (built once, outside the grid).
    hw = jnp.arange(HW)
    h_idx = hw // W
    w_idx = hw % W
    p_h = (h_idx[:, None] == jnp.arange(H)[None, :]).astype(jnp.float32) / W  # (HW, H)
    p_w = (w_idx[:, None] == jnp.arange(W)[None, :]).astype(jnp.float32) / H  # (HW, W)
    pool = jnp.concatenate([p_h, p_w], axis=1)                                # (HW, H+W)
    e_h = (p_h * W).T                                                         # (H, HW)
    e_w = (p_w * H).T                                                         # (W, HW)

    nb = _pick_block_batch(N)
    grid = (N // nb,)

    x_flat = x.reshape(N, C, HW).astype(jnp.float32)   # contiguous, free in HBM

    out_flat = pl.pallas_call(
        _ca_block_kernel,
        out_shape=jax.ShapeDtypeStruct((N, C, HW), jnp.float32),
        grid_spec=pltpu.PrefetchScalarGridSpec(
            num_scalar_prefetch=0,
            grid=grid,
            in_specs=[
                pl.BlockSpec((nb, C, HW), lambda g: (g, 0, 0)),   # x (lane-dense)
                pl.BlockSpec((HW, L), lambda g: (0, 0)),          # fused pooling matrix
                pl.BlockSpec((Cr, C), lambda g: (0, 0)),          # conv_1x1 (BN scale folded)
                pl.BlockSpec((C, Cr), lambda g: (0, 0)),          # F_h weight
                pl.BlockSpec((C, Cr), lambda g: (0, 0)),          # F_w weight
                pl.BlockSpec((H, HW), lambda g: (0, 0)),          # gate expansion along W
                pl.BlockSpec((W, HW), lambda g: (0, 0)),          # gate expansion along H
                pl.BlockSpec((Cr, 1), lambda g: (0, 0)),          # folded BN bias
            ],
            out_specs=pl.BlockSpec((nb, C, HW), lambda g: (g, 0, 0)),
        ),
        compiler_params=pltpu.CompilerParams(
            dimension_semantics=("parallel",),
        ),
    )(x_flat, pool, w1s, wh.astype(jnp.float32), ww.astype(jnp.float32),
      e_h, e_w, bias)

    return out_flat.reshape(N, C, H, W)


def ca_block_reference(x, w1, wh, ww, bn_gamma, bn_beta, bn_mean, bn_var, eps=1e-5):
    """Pure-JAX reference mirroring the PyTorch forward (eval-mode BN)."""
    N, C, H, W = x.shape
    x_h = jnp.mean(x, axis=3)                              # (N, C, H)
    x_w = jnp.mean(x, axis=2)                              # (N, C, W)
    cat = jnp.concatenate([x_h, x_w], axis=2)              # (N, C, H+W)
    y = jnp.einsum("rc,ncl->nrl", w1, cat)                 # (N, Cr, H+W)
    inv_std = 1.0 / jnp.sqrt(bn_var + eps)
    y = (y - bn_mean[None, :, None]) * inv_std[None, :, None]
    y = y * bn_gamma[None, :, None] + bn_beta[None, :, None]
    y = jnp.maximum(y, 0.0)
    a_h, a_w = y[:, :, :H], y[:, :, H:]
    s_h = jax.nn.sigmoid(jnp.einsum("cr,nrh->nch", wh, a_h))   # (N, C, H)
    s_w = jax.nn.sigmoid(jnp.einsum("cr,nrw->ncw", ww, a_w))   # (N, C, W)
    return x * s_h[:, :, :, None] * s_w[:, :, None, :]


if __name__ == "__main__":
    # Small shapes consistent with the module: channel divisible by reduction.
    N, C, H, W = 2, 64, 16, 16
    reduction = 16
    Cr = C // reduction

    key = jax.random.PRNGKey(0)
    kx, k1, k2, k3, k4, k5, k6 = jax.random.split(key, 7)

    x = jax.random.normal(kx, (N, C, H, W), dtype=jnp.float32)

    # Deterministic parameter init (synthetic weights, no checkpoint).
    w1 = 0.1 * jax.random.normal(k1, (Cr, C), dtype=jnp.float32)   # conv_1x1
    wh = 0.1 * jax.random.normal(k2, (C, Cr), dtype=jnp.float32)   # F_h
    ww = 0.1 * jax.random.normal(k3, (C, Cr), dtype=jnp.float32)   # F_w
    bn_gamma = 1.0 + 0.1 * jax.random.normal(k4, (Cr,), dtype=jnp.float32)
    bn_beta = 0.1 * jax.random.normal(k5, (Cr,), dtype=jnp.float32)
    bn_mean = 0.05 * jax.random.normal(k6, (Cr,), dtype=jnp.float32)
    bn_var = jnp.ones((Cr,), dtype=jnp.float32)

    out = ca_block(x, w1, wh, ww, bn_gamma, bn_beta, bn_mean, bn_var)
    out = jax.block_until_ready(out)

    ref = ca_block_reference(x, w1, wh, ww, bn_gamma, bn_beta, bn_mean, bn_var)
    ref = jax.block_until_ready(ref)

    np.testing.assert_allclose(np.asarray(out), np.asarray(ref), rtol=1e-5, atol=2e-5)
    print("KERNEL_OK")
</pallas_src>

<mosaic_0001>
module attributes {stable_mosaic.version = 11 : i64} {
  func.func @_ca_block_kernel(%arg0: i32, %arg1: memref<1x64x256xf32, #tpu.memory_space<vmem>>, %arg2: memref<256x32xf32, #tpu.memory_space<vmem>>, %arg3: memref<4x64xf32, #tpu.memory_space<vmem>>, %arg4: memref<64x4xf32, #tpu.memory_space<vmem>>, %arg5: memref<64x4xf32, #tpu.memory_space<vmem>>, %arg6: memref<16x256xf32, #tpu.memory_space<vmem>>, %arg7: memref<16x256xf32, #tpu.memory_space<vmem>>, %arg8: memref<4x1xf32, #tpu.memory_space<vmem>>, %arg9: memref<1x64x256xf32, #tpu.memory_space<vmem>>) attributes {dimension_semantics = [#tpu.dimension_semantics<parallel>], iteration_bounds = array<i64: 2>, scalar_prefetch = 0 : i64, scratch_operands = 0 : i64, tpu.core_type = #tpu.core_type<tc>, window_params = [{transform_indices = @transform_0, window_bounds = array<i64: 1, 64, 256>}, {pipeline_mode = #tpu.pipeline_mode<synchronous>, transform_indices = @transform_1, window_bounds = array<i64: 256, 32>}, {pipeline_mode = #tpu.pipeline_mode<synchronous>, transform_indices = @transform_2, window_bounds = array<i64: 4, 64>}, {pipeline_mode = #tpu.pipeline_mode<synchronous>, transform_indices = @transform_3, window_bounds = array<i64: 64, 4>}, {pipeline_mode = #tpu.pipeline_mode<synchronous>, transform_indices = @transform_4, window_bounds = array<i64: 64, 4>}, {pipeline_mode = #tpu.pipeline_mode<synchronous>, transform_indices = @transform_5, window_bounds = array<i64: 16, 256>}, {pipeline_mode = #tpu.pipeline_mode<synchronous>, transform_indices = @transform_6, window_bounds = array<i64: 16, 256>}, {pipeline_mode = #tpu.pipeline_mode<synchronous>, transform_indices = @transform_7, window_bounds = array<i64: 4, 1>}, {transform_indices = @transform_8, window_bounds = array<i64: 1, 64, 256>}]} {
    %c0 = arith.constant 0 : index
    %c0_0 = arith.constant 0 : index
    %c0_1 = arith.constant 0 : index
    %0 = vector.load %arg1[%c0, %c0_0, %c0_1] : memref<1x64x256xf32, #tpu.memory_space<vmem>>, vector<1x64x256xf32>
    %1 = vector.shape_cast %0 : vector<1x64x256xf32> to vector<64x256xf32>
    %c0_2 = arith.constant 0 : index
    %c0_3 = arith.constant 0 : index
    %2 = vector.load %arg2[%c0_2, %c0_3] : memref<256x32xf32, #tpu.memory_space<vmem>>, vector<256x32xf32>
    %cst = arith.constant dense<0.000000e+00> : vector<64x32xf32>
    %3 = tpu.matmul %1, %2, %cst {dimension_numbers = #tpu.dot_dimension_numbers<[1], [0], [0], [1], [0, 0, 1, 1], [], []>} : vector<64x256xf32>, vector<256x32xf32>, vector<64x32xf32> -> vector<64x32xf32>
    %c0_4 = arith.constant 0 : index
    %c0_5 = arith.constant 0 : index
    %4 = vector.load %arg8[%c0_4, %c0_5] : memref<4x1xf32, #tpu.memory_space<vmem>>, vector<4x1xf32>
    %c0_6 = arith.constant 0 : index
    %c0_7 = arith.constant 0 : index
    %5 = vector.load %arg3[%c0_6, %c0_7] : memref<4x64xf32, #tpu.memory_space<vmem>>, vector<4x64xf32>
    %c0_8 = arith.constant 0 : index
    %c0_9 = arith.constant 0 : index
    %6 = vector.load %arg4[%c0_8, %c0_9] : memref<64x4xf32, #tpu.memory_space<vmem>>, vector<64x4xf32>
    %c0_10 = arith.constant 0 : index
    %c0_11 = arith.constant 0 : index
    %7 = vector.load %arg5[%c0_10, %c0_11] : memref<64x4xf32, #tpu.memory_space<vmem>>, vector<64x4xf32>
    %c0_12 = arith.constant 0 : index
    %c0_13 = arith.constant 0 : index
    %8 = vector.load %arg6[%c0_12, %c0_13] : memref<16x256xf32, #tpu.memory_space<vmem>>, vector<16x256xf32>
    %c0_14 = arith.constant 0 : index
    %c0_15 = arith.constant 0 : index
    %9 = vector.load %arg7[%c0_14, %c0_15] : memref<16x256xf32, #tpu.memory_space<vmem>>, vector<16x256xf32>
    %cst_16 = arith.constant dense<0.000000e+00> : vector<4x32xf32>
    %10 = tpu.matmul %5, %3, %cst_16 {dimension_numbers = #tpu.dot_dimension_numbers<[1], [0], [0], [1], [0, 0, 1, 1], [], []>} : vector<4x64xf32>, vector<64x32xf32>, vector<4x32xf32> -> vector<4x32xf32>
    %11 = vector.broadcast %4 : vector<4x1xf32> to vector<4x32xf32>
    %12 = arith.addf %10, %11 : vector<4x32xf32>
    %cst_17 = arith.constant 0.000000e+00 : f32
    %13 = vector.broadcast %cst_17 : f32 to vector<4x32xf32>
    %14 = arith.maximumf %12, %13 : vector<4x32xf32>
    %15 = vector.extract_strided_slice %14 {offsets = [0, 0], sizes = [4, 16], strides = [1, 1]} : vector<4x32xf32> to vector<4x16xf32>
    %16 = vector.extract_strided_slice %14 {offsets = [0, 16], sizes = [4, 16], strides = [1, 1]} : vector<4x32xf32> to vector<4x16xf32>
    %cst_18 = arith.constant dense<0.000000e+00> : vector<64x16xf32>
    %17 = tpu.matmul %6, %15, %cst_18 {dimension_numbers = #tpu.dot_dimension_numbers<[1], [0], [0], [1], [0, 0, 1, 1], [], []>} : vector<64x4xf32>, vector<4x16xf32>, vector<64x16xf32> -> vector<64x16xf32>
    %18 = arith.negf %17 : vector<64x16xf32>
    %19 = math.exp %18 : vector<64x16xf32>
    %cst_19 = arith.constant 1.000000e+00 : f32
    %20 = vector.broadcast %cst_19 : f32 to vector<64x16xf32>
    %21 = arith.addf %20, %19 : vector<64x16xf32>
    %22 = arith.divf %20, %21 : vector<64x16xf32>
    %cst_20 = arith.constant dense<0.000000e+00> : vector<64x16xf32>
    %23 = tpu.matmul %7, %16, %cst_20 {dimension_numbers = #tpu.dot_dimension_numbers<[1], [0], [0], [1], [0, 0, 1, 1], [], []>} : vector<64x4xf32>, vector<4x16xf32>, vector<64x16xf32> -> vector<64x16xf32>
    %24 = arith.negf %23 : vector<64x16xf32>
    %25 = math.exp %24 : vector<64x16xf32>
    %cst_21 = arith.constant 1.000000e+00 : f32
    %26 = vector.broadcast %cst_21 : f32 to vector<64x16xf32>
    %27 = arith.addf %26, %25 : vector<64x16xf32>
    %28 = arith.divf %26, %27 : vector<64x16xf32>
    %cst_22 = arith.constant dense<0.000000e+00> : vector<64x256xf32>
    %29 = tpu.matmul %22, %8, %cst_22 {dimension_numbers = #tpu.dot_dimension_numbers<[1], [0], [0], [1], [0, 0, 1, 1], [], []>} : vector<64x16xf32>, vector<16x256xf32>, vector<64x256xf32> -> vector<64x256xf32>
    %cst_23 = arith.constant dense<0.000000e+00> : vector<64x256xf32>
    %30 = tpu.matmul %28, %9, %cst_23 {dimension_numbers = #tpu.dot_dimension_numbers<[1], [0], [0], [1], [0, 0, 1, 1], [], []>} : vector<64x16xf32>, vector<16x256xf32>, vector<64x256xf32> -> vector<64x256xf32>
    %31 = vector.shape_cast %0 : vector<1x64x256xf32> to vector<64x256xf32>
    %32 = arith.mulf %31, %29 : vector<64x256xf32>
    %33 = arith.mulf %32, %30 : vector<64x256xf32>
    %c0_24 = arith.constant 0 : index
    %c0_25 = arith.constant 0 : index
    %c0_26 = arith.constant 0 : index
    %34 = vector.load %arg9[%c0_24, %c0_25, %c0_26] : memref<1x64x256xf32, #tpu.memory_space<vmem>>, vector<1x64x256xf32>
    %35 = vector.shape_cast %34 : vector<1x64x256xf32> to vector<64x256xf32>
    %36 = vector.shape_cast %33 : vector<64x256xf32> to vector<1x64x256xf32>
    tpu.vector_store %arg9[%c0_24, %c0_25, %c0_26], %36 {strides = array<i32>} : memref<1x64x256xf32, #tpu.memory_space<vmem>>, vector<1x64x256xf32>,
    return
  }
  func.func @transform_0(%arg0: i32) -> (i32, i32, i32) {
    %c0_i32 = arith.constant 0 : i32
    %c0_i32_0 = arith.constant 0 : i32
    %c0_i32_1 = arith.constant 0 : i32
    return %arg0, %c0_i32, %c0_i32_0 : i32, i32, i32
  }
  func.func @transform_1(%arg0: i32) -> (i32, i32) {
    %c0_i32 = arith.constant 0 : i32
    %c0_i32_0 = arith.constant 0 : i32
    %c0_i32_1 = arith.constant 0 : i32
    return %c0_i32, %c0_i32_0 : i32, i32
  }
  func.func @transform_2(%arg0: i32) -> (i32, i32) {
    %c0_i32 = arith.constant 0 : i32
    %c0_i32_0 = arith.constant 0 : i32
    %c0_i32_1 = arith.constant 0 : i32
    return %c0_i32, %c0_i32_0 : i32, i32
  }
  func.func @transform_3(%arg0: i32) -> (i32, i32) {
    %c0_i32 = arith.constant 0 : i32
    %c0_i32_0 = arith.constant 0 : i32
    %c0_i32_1 = arith.constant 0 : i32
    return %c0_i32, %c0_i32_0 : i32, i32
  }
  func.func @transform_4(%arg0: i32) -> (i32, i32) {
    %c0_i32 = arith.constant 0 : i32
    %c0_i32_0 = arith.constant 0 : i32
    %c0_i32_1 = arith.constant 0 : i32
    return %c0_i32, %c0_i32_0 : i32, i32
  }
  func.func @transform_5(%arg0: i32) -> (i32, i32) {
    %c0_i32 = arith.constant 0 : i32
    %c0_i32_0 = arith.constant 0 : i32
    %c0_i32_1 = arith.constant 0 : i32
    return %c0_i32, %c0_i32_0 : i32, i32
  }
  func.func @transform_6(%arg0: i32) -> (i32, i32) {
    %c0_i32 = arith.constant 0 : i32
    %c0_i32_0 = arith.constant 0 : i32
    %c0_i32_1 = arith.constant 0 : i32
    return %c0_i32, %c0_i32_0 : i32, i32
  }
  func.func @transform_7(%arg0: i32) -> (i32, i32) {
    %c0_i32 = arith.constant 0 : i32
    %c0_i32_0 = arith.constant 0 : i32
    %c0_i32_1 = arith.constant 0 : i32
    return %c0_i32, %c0_i32_0 : i32, i32
  }
  func.func @transform_8(%arg0: i32) -> (i32, i32, i32) {
    %c0_i32 = arith.constant 0 : i32
    %c0_i32_0 = arith.constant 0 : i32
    %c0_i32_1 = arith.constant 0 : i32
    return %arg0, %c0_i32, %c0_i32_0 : i32, i32, i32
  }
}

</mosaic_0001>

<llo_original>
// kernel: tpu_custom_call.1
$region0: #{tpu_custom_call.1}
  #allocation0 [shape = 'u32[]', space=smem, size = 0x4, offset = 0x4, fixed_abs, tag = 'smem constant byte address 0x4 - core index']
  #allocation1 [shape = 'u32[144,128]{1,0:T(1,128)}', space=vmem, size = 0x12000, scoped, tag = 'internal scratch']
  %s0 = inlined_call_operand.vmem [shape: f32[2,64,256], index: 0, kind: input, shape index: {}]
  %s1 = inlined_call_operand.vmem [shape: f32[256,32], index: 1, kind: input, shape index: {}]
  %s2 = inlined_call_operand.vmem [shape: f32[4,64], index: 2, kind: input, shape index: {}]
  %s3 = inlined_call_operand.vmem [shape: f32[64,4], index: 3, kind: input, shape index: {}]
  %s4 = inlined_call_operand.vmem [shape: f32[64,4], index: 4, kind: input, shape index: {}]
  %s5 = inlined_call_operand.vmem [shape: f32[16,256], index: 5, kind: input, shape index: {}]
  %s6 = inlined_call_operand.vmem [shape: f32[16,256], index: 6, kind: input, shape index: {}]
  %s7 = inlined_call_operand.vmem [shape: f32[4,1], index: 7, kind: input, shape index: {}]
  %s8 = inlined_call_operand.hbm [shape: f32[2,64,256], index: 8, kind: output, shape index: {}]
  %s9 = sld [smem:[#allocation0]]
  $region65: #{tpu_custom_call.1} parent=0
    _
  %s11 = ssub.s32 1, %s9
  %s12 = scalar_select 0, %s11, %s9
  $region1: #{tpu_custom_call.1} parent=0
    #allocation2 [shape = 'u8[131072]{0}', space=vmem, size = 0x20000, scoped, tag = 'output window, operand 0']
    #allocation3 [shape = 's32[2]{0}', space=sflag, size = 0x8, scoped, tag = 'scoped memory for tpu_custom_call.1']
    %13 = vsyncpa [#allocation3], 0
    %s14 = scalar_lea.sflag [#allocation3], 1
    %15 = vsyncpa %s14, 0
    loop: start=0, step=1, limit=4
    $region2: #{tpu_custom_call.1} parent=1 // loop_pre_header
      _
    $region3: #{tpu_custom_call.1} parent=1 // loop_header
      %s17 = sphi 0, %s21
      %p18 = scmp.ge.s32.totalorder %s17, 4
      %s27 = sphi 0, %s29
      %s30 = sphi 0, %s27
      %s31 = sphi 0, %s30
      %s47 = sphi 0, %s31
      %s51 = sphi 0, %s51
      %s53 = sphi 0, %s51
      %s54 = sphi 0, %s53
      %s68 = sphi 0, %s54
      %s72 = sphi 0, %s72
      %s74 = sphi 0, %s72
      %s75 = sphi 0, %s74
      %s89 = sphi 0, %s75
      %s93 = sphi 0, %s93
      %s95 = sphi 0, %s93
      %s96 = sphi 0, %s95
      %s110 = sphi 0, %s96
      %s114 = sphi 0, %s114
      %s116 = sphi 0, %s114
      %s117 = sphi 0, %s116
      %s131 = sphi 0, %s117
      %s135 = sphi 0, %s135
      %s137 = sphi 0, %s135
      %s138 = sphi 0, %s137
      %s152 = sphi 0, %s138
      %s156 = sphi 0, %s156
      %s158 = sphi 0, %s156
      %s159 = sphi 0, %s158
      %s173 = sphi 0, %s159
      %s177 = sphi 0, %s177
      %s179 = sphi 0, %s177
      %s180 = sphi 0, %s179
      %s194 = sphi 0, %s180
      %s200 = sphi 0, %s202
      %s203 = sphi 0, %s200
      %s204 = sphi 0, %s203
      %s220 = sphi 0, %s204
    $region4: #{tpu_custom_call.1} parent=1 // loop_header_branch
      %20 = sbr.rel (%p18) target = $region8
    $region5: #{tpu_custom_call.1} parent=1 // loop_body
      %s22 = ssub.s32 %s17, 1
      %s23 = ssub.s32 %s17, 2
      %s24 = sadd.s32 %s17, 1
      %s25 = ssub.s32 %s17, %s24
      %p26 = scmp.eq.s32.totalorder %s25, 0
      %s28 = sadd.s32 %s27, 1
      %s29 = scalar_select %p26, %s27, %s28
      %p32 = pneg %p26
      %p33 = scmp.eq.s32.totalorder %s17, 1
      %p34 = por %p32, %p33
      %p35 = scmp.ne.s32.totalorder %s27, %s30
      %p36 = scmp.eq.s32.totalorder %s17, 0
      %p37 = por %p35, %p36
      %p38 = scmp.ne.s32.totalorder %s27, %s30
      %p39 = scmp.eq.s32.totalorder %s22, 1
      %p40 = por %p38, %p39
      %p41 = scmp.ne.s32.totalorder %s30, %s31
      %p42 = scmp.eq.s32.totalorder %s22, 0
      %p43 = por %p41, %p42
      %p44 = scmp.ne.s32.totalorder %s30, %s31
      %p45 = scmp.eq.s32.totalorder %s23, 1
      %p46 = por %p44, %p45
      %p48 = scmp.ne.s32.totalorder %s31, %s47
      %p49 = scmp.eq.s32.totalorder %s23, 0
      %p50 = por %p48, %p49
      %s52 = sadd.s32 %s51, 1
      %p55 = scmp.eq.s32.totalorder %s17, 1
      %p56 = scmp.ne.s32.totalorder %s51, %s53
      %p57 = scmp.eq.s32.totalorder %s17, 0
      %p58 = por %p56, %p57
      %p59 = scmp.ne.s32.totalorder %s51, %s53
      %p60 = scmp.eq.s32.totalorder %s22, 1
      %p61 = por %p59, %p60
      %p62 = scmp.ne.s32.totalorder %s53, %s54
      %p63 = scmp.eq.s32.totalorder %s22, 0
      %p64 = por %p62, %p63
      %p65 = scmp.ne.s32.totalorder %s53, %s54
      %p66 = scmp.eq.s32.totalorder %s23, 1
      %p67 = por %p65, %p66
      %p69 = scmp.ne.s32.totalorder %s54, %s68
      %p70 = scmp.eq.s32.totalorder %s23, 0
      %p71 = por %p69, %p70
      %s73 = sadd.s32 %s72, 1
      %p76 = scmp.eq.s32.totalorder %s17, 1
      %p77 = scmp.ne.s32.totalorder %s72, %s74
      %p78 = scmp.eq.s32.totalorder %s17, 0
      %p79 = por %p77, %p78
      %p80 = scmp.ne.s32.totalorder %s72, %s74
      %p81 = scmp.eq.s32.totalorder %s22, 1
      %p82 = por %p80, %p81
      %p83 = scmp.ne.s32.totalorder %s74, %s75
      %p84 = scmp.eq.s32.totalorder %s22, 0
      %p85 = por %p83, %p84
      %p86 = scmp.ne.s32.totalorder %s74, %s75
      %p87 = scmp.eq.s32.totalorder %s23, 1
      %p88 = por %p86, %p87
      %p90 = scmp.ne.s32.totalorder %s75, %s89
      %p91 = scmp.eq.s32.totalorder %s23, 0
      %p92 = por %p90, %p91
      %s94 = sadd.s32 %s93, 1
      %p97 = scmp.eq.s32.totalorder %s17, 1
      %p98 = scmp.ne.s32.totalorder %s93, %s95
      %p99 = scmp.eq.s32.totalorder %s17, 0
      %p100 = por %p98, %p99
      %p101 = scmp.ne.s32.totalorder %s93, %s95
      %p102 = scmp.eq.s32.totalorder %s22, 1
      %p103 = por %p101, %p102
      %p104 = scmp.ne.s32.totalorder %s95, %s96
      %p105 = scmp.eq.s32.totalorder %s22, 0
      %p106 = por %p104, %p105
      %p107 = scmp.ne.s32.totalorder %s95, %s96
      %p108 = scmp.eq.s32.totalorder %s23, 1
      %p109 = por %p107, %p108
      %p111 = scmp.ne.s32.totalorder %s96, %s110
      %p112 = scmp.eq.s32.totalorder %s23, 0
      %p113 = por %p111, %p112
      %s115 = sadd.s32 %s114, 1
      %p118 = scmp.eq.s32.totalorder %s17, 1
      %p119 = scmp.ne.s32.totalorder %s114, %s116
      %p120 = scmp.eq.s32.totalorder %s17, 0
      %p121 = por %p119, %p120
      %p122 = scmp.ne.s32.totalorder %s114, %s116
      %p123 = scmp.eq.s32.totalorder %s22, 1
      %p124 = por %p122, %p123
      %p125 = scmp.ne.s32.totalorder %s116, %s117
      %p126 = scmp.eq.s32.totalorder %s22, 0
      %p127 = por %p125, %p126
      %p128 = scmp.ne.s32.totalorder %s116, %s117
      %p129 = scmp.eq.s32.totalorder %s23, 1
      %p130 = por %p128, %p129
      %p132 = scmp.ne.s32.totalorder %s117, %s131
      %p133 = scmp.eq.s32.totalorder %s23, 0
      %p134 = por %p132, %p133
      %s136 = sadd.s32 %s135, 1
      %p139 = scmp.eq.s32.totalorder %s17, 1
      %p140 = scmp.ne.s32.totalorder %s135, %s137
      %p141 = scmp.eq.s32.totalorder %s17, 0
      %p142 = por %p140, %p141
      %p143 = scmp.ne.s32.totalorder %s135, %s137
      %p144 = scmp.eq.s32.totalorder %s22, 1
      %p145 = por %p143, %p144
      %p146 = scmp.ne.s32.totalorder %s137, %s138
      %p147 = scmp.eq.s32.totalorder %s22, 0
      %p148 = por %p146, %p147
      %p149 = scmp.ne.s32.totalorder %s137, %s138
      %p150 = scmp.eq.s32.totalorder %s23, 1
      %p151 = por %p149, %p150
      %p153 = scmp.ne.s32.totalorder %s138, %s152
      %p154 = scmp.eq.s32.totalorder %s23, 0
      %p155 = por %p153, %p154
      %s157 = sadd.s32 %s156, 1
      %p160 = scmp.eq.s32.totalorder %s17, 1
      %p161 = scmp.ne.s32.totalorder %s156, %s158
      %p162 = scmp.eq.s32.totalorder %s17, 0
      %p163 = por %p161, %p162
      %p164 = scmp.ne.s32.totalorder %s156, %s158
      %p165 = scmp.eq.s32.totalorder %s22, 1
      %p166 = por %p164, %p165
      %p167 = scmp.ne.s32.totalorder %s158, %s159
      %p168 = scmp.eq.s32.totalorder %s22, 0
      %p169 = por %p167, %p168
      %p170 = scmp.ne.s32.totalorder %s158, %s159
      %p171 = scmp.eq.s32.totalorder %s23, 1
      %p172 = por %p170, %p171
      %p174 = scmp.ne.s32.totalorder %s159, %s173
      %p175 = scmp.eq.s32.totalorder %s23, 0
      %p176 = por %p174, %p175
      %s178 = sadd.s32 %s177, 1
      %p181 = scmp.eq.s32.totalorder %s17, 1
      %p182 = scmp.ne.s32.totalorder %s177, %s179
      %p183 = scmp.eq.s32.totalorder %s17, 0
      %p184 = por %p182, %p183
      %p185 = scmp.ne.s32.totalorder %s177, %s179
      %p186 = scmp.eq.s32.totalorder %s22, 1
      %p187 = por %p185, %p186
      %p188 = scmp.ne.s32.totalorder %s179, %s180
      %p189 = scmp.eq.s32.totalorder %s22, 0
      %p190 = por %p188, %p189
      %p191 = scmp.ne.s32.totalorder %s179, %s180
      %p192 = scmp.eq.s32.totalorder %s23, 1
      %p193 = por %p191, %p192
      %p195 = scmp.ne.s32.totalorder %s180, %s194
      %p196 = scmp.eq.s32.totalorder %s23, 0
      %p197 = por %p195, %p196
      %s198 = ssub.s32 %s17, %s24
      %p199 = scmp.eq.s32.totalorder %s198, 0
      %s201 = sadd.s32 %s200, 1
      %s202 = scalar_select %p199, %s200, %s201
      %p205 = pneg %p199
      %p206 = scmp.eq.s32.totalorder %s17, 1
      %p207 = por %p205, %p206
      %p208 = scmp.ne.s32.totalorder %s200, %s203
      %p209 = scmp.eq.s32.totalorder %s17, 0
      %p210 = por %p208, %p209
      %p211 = scmp.ne.s32.totalorder %s200, %s203
      %p212 = scmp.eq.s32.totalorder %s22, 1
      %p213 = por %p211, %p212
      %p214 = scmp.ne.s32.totalorder %s203, %s204
      %p215 = scmp.eq.s32.totalorder %s22, 0
      %p216 = por %p214, %p215
      %p217 = scmp.ne.s32.totalorder %s203, %s204
      %p218 = scmp.eq.s32.totalorder %s23, 1
      %p219 = por %p217, %p218
      %p221 = scmp.ne.s32.totalorder %s204, %s220
      %p222 = scmp.eq.s32.totalorder %s23, 0
      %p223 = por %p221, %p222
      %p224 = scmp.le.s32.totalorder 1, %s17
      %p225 = scmp.lt.s32.totalorder %s17, 3
      %p226 = pnand %p224, %p225
      %p227 = pneg %p226
      // Predicated region
      $region9: #{tpu_custom_call.1} parent=5 // pred_check
        _
      $region10: #{tpu_custom_call.1} parent=5 // pred_check_branch
        %229 = sbr.rel (%p226) target = $region12
      $region11: #{tpu_custom_call.1} parent=5 // pred_region
        %s230 = ssub.s32 %s17, 1
        // Predicated region
        $region13: #{tpu_custom_call.1} parent=11 // pred_check
          %p231 = pneg %p64
        $region14: #{tpu_custom_call.1} parent=11 // pred_check_branch
          %233 = sbr.rel (%p231) target = $region16
        $region15: #{tpu_custom_call.1} parent=11 // pred_region
          _
        $region16: #{tpu_custom_call.1} parent=11 // pred_fallthru
          _
        // Predicated region
        $region17: #{tpu_custom_call.1} parent=11 // pred_check
          %p234 = pneg %p85
        $region18: #{tpu_custom_call.1} parent=11 // pred_check_branch
          %236 = sbr.rel (%p234) target = $region20
        $region19: #{tpu_custom_call.1} parent=11 // pred_region
          _
        $region20: #{tpu_custom_call.1} parent=11 // pred_fallthru
          _
        // Predicated region
        $region21: #{tpu_custom_call.1} parent=11 // pred_check
          %p237 = pneg %p106
        $region22: #{tpu_custom_call.1} parent=11 // pred_check_branch
          %239 = sbr.rel (%p237) target = $region24
        $region23: #{tpu_custom_call.1} parent=11 // pred_region
          _
        $region24: #{tpu_custom_call.1} parent=11 // pred_fallthru
          _
        // Predicated region
        $region25: #{tpu_custom_call.1} parent=11 // pred_check
          %p240 = pneg %p127
        $region26: #{tpu_custom_call.1} parent=11 // pred_check_branch
          %242 = sbr.rel (%p240) target = $region28
        $region27: #{tpu_custom_call.1} parent=11 // pred_region
          _
        $region28: #{tpu_custom_call.1} parent=11 // pred_fallthru
          _
        // Predicated region
        $region29: #{tpu_custom_call.1} parent=11 // pred_check
          %p243 = pneg %p148
        $region30: #{tpu_custom_call.1} parent=11 // pred_check_branch
          %245 = sbr.rel (%p243) target = $region32
        $region31: #{tpu_custom_call.1} parent=11 // pred_region
          _
        $region32: #{tpu_custom_call.1} parent=11 // pred_fallthru
          _
        // Predicated region
        $region33: #{tpu_custom_call.1} parent=11 // pred_check
          %p246 = pneg %p169
        $region34: #{tpu_custom_call.1} parent=11 // pred_check_branch
          %248 = sbr.rel (%p246) target = $region36
        $region35: #{tpu_custom_call.1} parent=11 // pred_region
          _
        $region36: #{tpu_custom_call.1} parent=11 // pred_fallthru
          _
        // Predicated region
        $region37: #{tpu_custom_call.1} parent=11 // pred_check
          %p249 = pneg %p190
        $region38: #{tpu_custom_call.1} parent=11 // pred_check_branch
          %251 = sbr.rel (%p249) target = $region40
        $region39: #{tpu_custom_call.1} parent=11 // pred_region
          _
        $region40: #{tpu_custom_call.1} parent=11 // pred_fallthru
          _
      $region12: #{tpu_custom_call.1} parent=5 // pred_fallthru
        _
      %p252 = scmp.lt.s32.totalorder %s17, 2
      // Predicated region
      $region41: #{tpu_custom_call.1} parent=5 // pred_check
        %p253 = pneg %p252
      $region42: #{tpu_custom_call.1} parent=5 // pred_check_branch
        %255 = sbr.rel (%p253) target = $region44
      $region43: #{tpu_custom_call.1} parent=5 // pred_region
        // Predicated region
        $region45: #{tpu_custom_call.1} parent=43 // pred_check
          %p256 = pneg %p37
        $region46: #{tpu_custom_call.1} parent=43 // pred_check_branch
          %258 = sbr.rel (%p256) target = $region48
        $region47: #{tpu_custom_call.1} parent=43 // pred_region
          %p259 = scmp.lt.s32.totalorder %s17, 1
          %s260 = scalar_select %p259, %s17, 1
          %s261 = smul.addr %s260, 16
          %s262 = smul.addr %s261, 8
          %s263 = scalar_lea.vmem %s0, %s262
        $region48: #{tpu_custom_call.1} parent=43 // pred_fallthru
          _
      $region44: #{tpu_custom_call.1} parent=5 // pred_fallthru
        _
      %p264 = scmp.le.s32.totalorder 1, %s17
      %p265 = scmp.lt.s32.totalorder %s17, 3
      %p266 = pnand %p264, %p265
      %p267 = pneg %p266
      // Predicated region
      $region49: #{tpu_custom_call.1} parent=5 // pred_check
        _
      $region50: #{tpu_custom_call.1} parent=5 // pred_check_branch
        %269 = sbr.rel (%p266) target = $region52
      $region51: #{tpu_custom_call.1} parent=5 // pred_region
        %s270 = ssub.s32 %s17, 1
        %p271 = scmp.lt.s32.totalorder %s22, 1
        %s272 = scalar_select %p271, %s22, 1
        %s273 = smul.addr %s272, 16
        %s274 = smul.addr %s273, 8
        %s275 = scalar_lea.vmem %s0, %s274
        %p276 = pneg %p43
        %p277 = pneg %p40
        %p278 = pneg %p64
        %p279 = pneg %p61
        %p280 = pneg %p85
        %p281 = pneg %p82
        %p282 = pneg %p106
        %p283 = pneg %p103
        %p284 = pneg %p127
        %p285 = pneg %p124
        %p286 = pneg %p148
        %p287 = pneg %p145
        %p288 = pneg %p169
        %p289 = pneg %p166
        %p290 = pneg %p190
        %p291 = pneg %p187
        %p292 = pneg %p216
        %p293 = pneg %p213
        %s294 = sand.u32 %s203, 1
        %s295 = scalar_lea.sflag [#allocation3], %s294
        %s296 = sand.u32 %s203, 1
        %s297 = smul.addr %s296, 128
        %s298 = scalar_lea.vmem [#allocation2], %s297
        %p299 = scmp.lt.s32.totalorder %s22, 1
        %s300 = scalar_select %p299, %s22, 1
        %s301 = smul.addr %s300, 16
        %s302 = smul.addr %s301, 8
        %s303 = scalar_lea.vmem %s0, %s302
        %v304 = vld [vmem:[%s303] sm:$0xff]
        %v305 = vld [vmem:[%s303 + $0x8] sm:$0xff]
        %v306 = vld [vmem:[%s303 + $0x10] sm:$0xff]
        %v307 = vld [vmem:[%s303 + $0x18] sm:$0xff]
        %v308 = vld [vmem:[%s303 + $0x20] sm:$0xff]
        %v309 = vld [vmem:[%s303 + $0x28] sm:$0xff]
        %v310 = vld [vmem:[%s303 + $0x30] sm:$0xff]
        %v311 = vld [vmem:[%s303 + $0x38] sm:$0xff]
        %v312 = vld [vmem:[%s303 + $0x40] sm:$0xff]
        %v313 = vld [vmem:[%s303 + $0x48] sm:$0xff]
        %v314 = vld [vmem:[%s303 + $0x50] sm:$0xff]
        %v315 = vld [vmem:[%s303 + $0x58] sm:$0xff]
        %v316 = vld [vmem:[%s303 + $0x60] sm:$0xff]
        %v317 = vld [vmem:[%s303 + $0x68] sm:$0xff]
        %v318 = vld [vmem:[%s303 + $0x70] sm:$0xff]
        %v319 = vld [vmem:[%s303 + $0x78] sm:$0xff]
        %v320 = vld [vmem:[%s1] sm:$0xff]
        %v321 = vld [vmem:[%s1 + $0x8] sm:$0xff]
        %v322 = vld [vmem:[%s1 + $0x10] sm:$0xff]
        %v323 = vld [vmem:[%s1 + $0x18] sm:$0xff]
        %v324 = vld [vmem:[%s1 + $0x20] sm:$0xff]
        %v325 = vld [vmem:[%s1 + $0x28] sm:$0xff]
        %v326 = vld [vmem:[%s1 + $0x30] sm:$0xff]
        %v327 = vld [vmem:[%s1 + $0x38] sm:$0xff]
        %v328 = vld [vmem:[%s1 + $0x40] sm:$0xff]
        %v329 = vld [vmem:[%s1 + $0x48] sm:$0xff]
        %v330 = vld [vmem:[%s1 + $0x50] sm:$0xff]
        %v331 = vld [vmem:[%s1 + $0x58] sm:$0xff]
        %v332 = vld [vmem:[%s1 + $0x60] sm:$0xff]
        %v333 = vld [vmem:[%s1 + $0x68] sm:$0xff]
        %v334 = vld [vmem:[%s1 + $0x70] sm:$0xff]
        %v335 = vld [vmem:[%s1 + $0x78] sm:$0xff]
        %v336 = vld [vmem:[%s1 + $0x80] sm:$0xff]
        %v337 = vld [vmem:[%s1 + $0x88] sm:$0xff]
        %v338 = vld [vmem:[%s1 + $0x90] sm:$0xff]
        %v339 = vld [vmem:[%s1 + $0x98] sm:$0xff]
        %v340 = vld [vmem:[%s1 + $0xa0] sm:$0xff]
        %v341 = vld [vmem:[%s1 + $0xa8] sm:$0xff]
        %v342 = vld [vmem:[%s1 + $0xb0] sm:$0xff]
        %v343 = vld [vmem:[%s1 + $0xb8] sm:$0xff]
        %v344 = vld [vmem:[%s1 + $0xc0] sm:$0xff]
        %v345 = vld [vmem:[%s1 + $0xc8] sm:$0xff]
        %v346 = vld [vmem:[%s1 + $0xd0] sm:$0xff]
        %v347 = vld [vmem:[%s1 + $0xd8] sm:$0xff]
        %v348 = vld [vmem:[%s1 + $0xe0] sm:$0xff]
        %v349 = vld [vmem:[%s1 + $0xe8] sm:$0xff]
        %v350 = vld [vmem:[%s1 + $0xf0] sm:$0xff]
        %v351 = vld [vmem:[%s1 + $0xf8] sm:$0xff]
        %352 = vmatprep.subr.mxu0 0.0
        %353 = vmatpush1.msra.mxu0 %v335
        %354 = vmatprep.subr.mxu0 0.0
        %355 = vmatpush1.msra.mxu0 %v334
        %356 = vmatprep.subr.mxu0 0.0
        %357 = vmatpush1.msra.mxu0 %v333
        %358 = vmatprep.subr.mxu0 0.0
        %359 = vmatpush1.msra.mxu0 %v332
        %360 = vmatprep.subr.mxu0 0.0
        %361 = vmatpush1.msra.mxu0 %v331
        %362 = vmatprep.subr.mxu0 0.0
        %363 = vmatpush1.msra.mxu0 %v330
        %364 = vmatprep.subr.mxu0 0.0
        %365 = vmatpush1.msra.mxu0 %v329
        %366 = vmatprep.subr.mxu0 0.0
        %367 = vmatpush1.msra.mxu0 %v328
        %368 = vmatprep.subr.mxu0 0.0
        %369 = vmatpush1.msra.mxu0 %v327
        %370 = vmatprep.subr.mxu0 0.0
        %371 = vmatpush1.msra.mxu0 %v326
        %372 = vmatprep.subr.mxu0 0.0
        %373 = vmatpush1.msra.mxu0 %v325
        %374 = vmatprep.subr.mxu0 0.0
        %375 = vmatpush1.msra.mxu0 %v324
        %376 = vmatprep.subr.mxu0 0.0
        %377 = vmatpush1.msra.mxu0 %v323
        %378 = vmatprep.subr.mxu0 0.0
        %379 = vmatpush1.msra.mxu0 %v322
        %380 = vmatprep.subr.mxu0 0.0
        %381 = vmatpush1.msra.mxu0 %v321
        %382 = vmatprep.subr.mxu0 0.0
        %383 = vmatpush1.msra.mxu0 %v320
        %384 = vmatprep.subr.mxu0 0.0
        %385 = vmatpush2.msra.mxu0 %v351
        %386 = vmatprep.subr.mxu0 0.0
        %387 = vmatpush2.msra.mxu0 %v350
        %388 = vmatprep.subr.mxu0 0.0
        %389 = vmatpush2.msra.mxu0 %v349
        %390 = vmatprep.subr.mxu0 0.0
        %391 = vmatpush2.msra.mxu0 %v348
        %392 = vmatprep.subr.mxu0 0.0
        %393 = vmatpush2.msra.mxu0 %v347
        %394 = vmatprep.subr.mxu0 0.0
        %395 = vmatpush2.msra.mxu0 %v346
        %396 = vmatprep.subr.mxu0 0.0
        %397 = vmatpush2.msra.mxu0 %v345
        %398 = vmatprep.subr.mxu0 0.0
        %399 = vmatpush2.msra.mxu0 %v344
        %400 = vmatprep.subr.mxu0 0.0
        %401 = vmatpush2.msra.mxu0 %v343
        %402 = vmatprep.subr.mxu0 0.0
        %403 = vmatpush2.msra.mxu0 %v342
        %404 = vmatprep.subr.mxu0 0.0
        %405 = vmatpush2.msra.mxu0 %v341
        %406 = vmatprep.subr.mxu0 0.0
        %407 = vmatpush2.msra.mxu0 %v340
        %408 = vmatprep.subr.mxu0 0.0
        %409 = vmatpush2.msra.mxu0 %v339
        %410 = vmatprep.subr.mxu0 0.0
        %411 = vmatpush2.msra.mxu0 %v338
        %412 = vmatprep.subr.mxu0 0.0
        %413 = vmatpush2.msra.mxu0 %v337
        %414 = vmatprep.subr.mxu0 0.0
        %415 = vmatpush2.msra.mxu0 %v336
        %416 = vmatprep.mubr.f32.mxu0 %v305
        %417 = vmatmul.mubr.f32.gmra.mxu0 %v304
        %v418 = vpop.f32.mrf.mxu0
        %v419 = vadd.f32 0.0, %v418
        %v420 = vpop.f32.mrf.mxu0
        %421 = vmatprep.mubr.f32.mxu0 %v307
        %422 = vmatmul.mubr.f32.gmra.mxu0 %v306
        %v423 = vpop.f32.mrf.mxu0
        %v424 = vadd.f32 0.0, %v423
        %v425 = vpop.f32.mrf.mxu0
        %426 = vmatprep.mubr.f32.mxu0 %v309
        %427 = vmatmul.mubr.f32.gmra.mxu0 %v308
        %v428 = vpop.f32.mrf.mxu0
        %v429 = vadd.f32 0.0, %v428
        %v430 = vpop.f32.mrf.mxu0
        %431 = vmatprep.mubr.f32.mxu0 %v311
        %432 = vmatmul.mubr.f32.gmra.mxu0 %v310
        %v433 = vpop.f32.mrf.mxu0
        %v434 = vadd.f32 0.0, %v433
        %v435 = vpop.f32.mrf.mxu0
        %436 = vmatprep.mubr.f32.mxu0 %v313
        %437 = vmatmul.mubr.f32.gmra.mxu0 %v312
        %v438 = vpop.f32.mrf.mxu0
        %v439 = vadd.f32 0.0, %v438
        %v440 = vpop.f32.mrf.mxu0
        %441 = vmatprep.mubr.f32.mxu0 %v315
        %442 = vmatmul.mubr.f32.gmra.mxu0 %v314
        %v443 = vpop.f32.mrf.mxu0
        %v444 = vadd.f32 0.0, %v443
        %v445 = vpop.f32.mrf.mxu0
        %446 = vmatprep.mubr.f32.mxu0 %v317
        %447 = vmatmul.mubr.f32.gmra.mxu0 %v316
        %v448 = vpop.f32.mrf.mxu0
        %v449 = vadd.f32 0.0, %v448
        %v450 = vpop.f32.mrf.mxu0
        %451 = vmatprep.mubr.f32.mxu0 %v319
        %452 = vmatmul.mubr.f32.gmra.mxu0 %v318
        %v453 = vpop.f32.mrf.mxu0
        %v454 = vadd.f32 0.0, %v453
        %v455 = vpop.f32.mrf.mxu0
        %456 = vdwg.mxu0
        %v457 = vld [vmem:[%s7] sm:$0xf]
        %v458 = vld [vmem:[%s2] sm:$0xf]
        %v459 = vld [vmem:[%s3] sm:$0xff]
        %v460 = vld [vmem:[%s3 + $0x8] sm:$0xff]
        %v461 = vld [vmem:[%s3 + $0x10] sm:$0xff]
        %v462 = vld [vmem:[%s3 + $0x18] sm:$0xff]
        %v463 = vld [vmem:[%s3 + $0x20] sm:$0xff]
        %v464 = vld [vmem:[%s3 + $0x28] sm:$0xff]
        %v465 = vld [vmem:[%s3 + $0x30] sm:$0xff]
        %v466 = vld [vmem:[%s3 + $0x38] sm:$0xff]
        %v467 = vld [vmem:[%s4] sm:$0xff]
        %v468 = vld [vmem:[%s4 + $0x8] sm:$0xff]
        %v469 = vld [vmem:[%s4 + $0x10] sm:$0xff]
        %v470 = vld [vmem:[%s4 + $0x18] sm:$0xff]
        %v471 = vld [vmem:[%s4 + $0x20] sm:$0xff]
        %v472 = vld [vmem:[%s4 + $0x28] sm:$0xff]
        %v473 = vld [vmem:[%s4 + $0x30] sm:$0xff]
        %v474 = vld [vmem:[%s4 + $0x38] sm:$0xff]
        %v475 = vld [vmem:[%s5] sm:$0xff]
        %v476 = vld [vmem:[%s5 + $0x8] sm:$0xff]
        %v477 = vld [vmem:[%s5 + $0x10] sm:$0xff]
        %v478 = vld [vmem:[%s5 + $0x18] sm:$0xff]
        %v479 = vld [vmem:[%s6] sm:$0xff]
        %v480 = vld [vmem:[%s6 + $0x8] sm:$0xff]
        %v481 = vld [vmem:[%s6 + $0x10] sm:$0xff]
        %v482 = vld [vmem:[%s6 + $0x18] sm:$0xff]
        %484 = vset.pattern.permute.xlu0 0
        %485 = vperm.xlu0 %484, %v457
        %v486 = vpop.permute.xlu0 %485
        %vm488 = vcmask 523264
        %v490 = vsel %vm488, %v458, 0
        %492 = vmatprep.subr.mxu0 0.0
        %493 = vmatpush1.msra.mxu0 0.0
        %494 = vmatprep.subr.mxu0 0.0
        %495 = vmatpush1.msra.mxu0 0.0
        %496 = vmatprep.subr.mxu0 0.0
        %497 = vmatpush1.msra.mxu0 0.0
        %498 = vmatprep.subr.mxu0 0.0
        %499 = vmatpush1.msra.mxu0 0.0
        %500 = vmatprep.subr.mxu0 0.0
        %501 = vmatpush1.msra.mxu0 0.0
        %502 = vmatprep.subr.mxu0 0.0
        %503 = vmatpush1.msra.mxu0 0.0
        %504 = vmatprep.subr.mxu0 0.0
        %505 = vmatpush1.msra.mxu0 0.0
        %506 = vmatprep.subr.mxu0 0.0
        %507 = vmatpush1.msra.mxu0 0.0
        %508 = vmatprep.subr.mxu0 0.0
        %509 = vmatpush1.msra.mxu0 %v454
        %510 = vmatprep.subr.mxu0 0.0
        %511 = vmatpush1.msra.mxu0 %v449
        %512 = vmatprep.subr.mxu0 0.0
        %513 = vmatpush1.msra.mxu0 %v444
        %514 = vmatprep.subr.mxu0 0.0
        %515 = vmatpush1.msra.mxu0 %v439
        %516 = vmatprep.subr.mxu0 0.0
        %517 = vmatpush1.msra.mxu0 %v434
        %518 = vmatprep.subr.mxu0 0.0
        %519 = vmatpush1.msra.mxu0 %v429
        %520 = vmatprep.subr.mxu0 0.0
        %521 = vmatpush1.msra.mxu0 %v424
        %522 = vmatprep.subr.mxu0 0.0
        %523 = vmatpush1.msra.mxu0 %v419
        %524 = vmatprep.subr.mxu0 0.0
        %525 = vmatpush2.msra.mxu0 0.0
        %526 = vmatprep.subr.mxu0 0.0
        %527 = vmatpush2.msra.mxu0 0.0
        %528 = vmatprep.subr.mxu0 0.0
        %529 = vmatpush2.msra.mxu0 0.0
        %530 = vmatprep.subr.mxu0 0.0
        %531 = vmatpush2.msra.mxu0 0.0
        %532 = vmatprep.subr.mxu0 0.0
        %533 = vmatpush2.msra.mxu0 0.0
        %534 = vmatprep.subr.mxu0 0.0
        %535 = vmatpush2.msra.mxu0 0.0
        %536 = vmatprep.subr.mxu0 0.0
        %537 = vmatpush2.msra.mxu0 0.0
        %538 = vmatprep.subr.mxu0 0.0
        %539 = vmatpush2.msra.mxu0 0.0
        %540 = vmatprep.subr.mxu0 0.0
        %541 = vmatpush2.msra.mxu0 0.0
        %542 = vmatprep.subr.mxu0 0.0
        %543 = vmatpush2.msra.mxu0 0.0
        %544 = vmatprep.subr.mxu0 0.0
        %545 = vmatpush2.msra.mxu0 0.0
        %546 = vmatprep.subr.mxu0 0.0
        %547 = vmatpush2.msra.mxu0 0.0
        %548 = vmatprep.subr.mxu0 0.0
        %549 = vmatpush2.msra.mxu0 0.0
        %550 = vmatprep.subr.mxu0 0.0
        %551 = vmatpush2.msra.mxu0 0.0
        %552 = vmatprep.subr.mxu0 0.0
        %553 = vmatpush2.msra.mxu0 0.0
        %554 = vmatprep.subr.mxu0 0.0
        %555 = vmatpush2.msra.mxu0 0.0
        %556 = vmatprep.mubr.f32.mxu0 0.0
        %557 = vmatmul.mubr.f32.gmra.mxu0 %v490
        %v558 = vpop.f32.mrf.mxu0
        %v559 = vadd.f32 %v486, %v558
        %v560 = vpop.f32.mrf.mxu0
        %561 = vdwg.mxu0
        %v562 = vmax.f32 %v559, 0.0
        %vm563 = vcmask 31744
        %v565 = vsel %vm563, %v459, 0
        %v568 = vsel %vm563, %v460, 0
        %v571 = vsel %vm563, %v461, 0
        %v574 = vsel %vm563, %v462, 0
        %v577 = vsel %vm563, %v463, 0
        %v580 = vsel %vm563, %v464, 0
        %v583 = vsel %vm563, %v465, 0
        %v586 = vsel %vm563, %v466, 0
        %vm588 = vcmask 1043456
        %v590 = vsel %vm588, %v562, 0
        %592 = vmatprep.subr.mxu0 0.0
        %593 = vmatpush1.msra.mxu0 0.0
        %594 = vmatprep.subr.mxu0 0.0
        %595 = vmatpush1.msra.mxu0 0.0
        %596 = vmatprep.subr.mxu0 0.0
        %597 = vmatpush1.msra.mxu0 0.0
        %598 = vmatprep.subr.mxu0 0.0
        %599 = vmatpush1.msra.mxu0 0.0
        %600 = vmatprep.subr.mxu0 0.0
        %601 = vmatpush1.msra.mxu0 0.0
        %602 = vmatprep.subr.mxu0 0.0
        %603 = vmatpush1.msra.mxu0 0.0
        %604 = vmatprep.subr.mxu0 0.0
        %605 = vmatpush1.msra.mxu0 0.0
        %606 = vmatprep.subr.mxu0 0.0
        %607 = vmatpush1.msra.mxu0 0.0
        %608 = vmatprep.subr.mxu0 0.0
        %609 = vmatpush1.msra.mxu0 0.0
        %610 = vmatprep.subr.mxu0 0.0
        %611 = vmatpush1.msra.mxu0 0.0
        %612 = vmatprep.subr.mxu0 0.0
        %613 = vmatpush1.msra.mxu0 0.0
        %614 = vmatprep.subr.mxu0 0.0
        %615 = vmatpush1.msra.mxu0 0.0
        %616 = vmatprep.subr.mxu0 0.0
        %617 = vmatpush1.msra.mxu0 0.0
        %618 = vmatprep.subr.mxu0 0.0
        %619 = vmatpush1.msra.mxu0 0.0
        %620 = vmatprep.subr.mxu0 0.0
        %621 = vmatpush1.msra.mxu0 0.0
        %622 = vmatprep.subr.mxu0 0.0
        %623 = vmatpush1.msra.mxu0 %v590
        %624 = vmatprep.subr.mxu0 0.0
        %625 = vmatpush2.msra.mxu0 0.0
        %626 = vmatprep.subr.mxu0 0.0
        %627 = vmatpush2.msra.mxu0 0.0
        %628 = vmatprep.subr.mxu0 0.0
        %629 = vmatpush2.msra.mxu0 0.0
        %630 = vmatprep.subr.mxu0 0.0
        %631 = vmatpush2.msra.mxu0 0.0
        %632 = vmatprep.subr.mxu0 0.0
        %633 = vmatpush2.msra.mxu0 0.0
        %634 = vmatprep.subr.mxu0 0.0
        %635 = vmatpush2.msra.mxu0 0.0
        %636 = vmatprep.subr.mxu0 0.0
        %637 = vmatpush2.msra.mxu0 0.0
        %638 = vmatprep.subr.mxu0 0.0
        %639 = vmatpush2.msra.mxu0 0.0
        %640 = vmatprep.subr.mxu0 0.0
        %641 = vmatpush2.msra.mxu0 0.0
        %642 = vmatprep.subr.mxu0 0.0
        %643 = vmatpush2.msra.mxu0 0.0
        %644 = vmatprep.subr.mxu0 0.0
        %645 = vmatpush2.msra.mxu0 0.0
        %646 = vmatprep.subr.mxu0 0.0
        %647 = vmatpush2.msra.mxu0 0.0
        %648 = vmatprep.subr.mxu0 0.0
        %649 = vmatpush2.msra.mxu0 0.0
        %650 = vmatprep.subr.mxu0 0.0
        %651 = vmatpush2.msra.mxu0 0.0
        %652 = vmatprep.subr.mxu0 0.0
        %653 = vmatpush2.msra.mxu0 0.0
        %654 = vmatprep.subr.mxu0 0.0
        %655 = vmatpush2.msra.mxu0 0.0
        %656 = vmatprep.mubr.f32.mxu0 0.0
        %657 = vmatmul.mubr.f32.gmra.mxu0 %v565
        %v658 = vpop.f32.mrf.mxu0
        %v659 = vadd.f32 0.0, %v658
        %v660 = vpop.f32.mrf.mxu0
        %661 = vmatprep.mubr.f32.mxu0 0.0
        %662 = vmatmul.mubr.f32.gmra.mxu0 %v568
        %v663 = vpop.f32.mrf.mxu0
        %v664 = vadd.f32 0.0, %v663
        %v665 = vpop.f32.mrf.mxu0
        %666 = vmatprep.mubr.f32.mxu0 0.0
        %667 = vmatmul.mubr.f32.gmra.mxu0 %v571
        %v668 = vpop.f32.mrf.mxu0
        %v669 = vadd.f32 0.0, %v668
        %v670 = vpop.f32.mrf.mxu0
        %671 = vmatprep.mubr.f32.mxu0 0.0
        %672 = vmatmul.mubr.f32.gmra.mxu0 %v574
        %v673 = vpop.f32.mrf.mxu0
        %v674 = vadd.f32 0.0, %v673
        %v675 = vpop.f32.mrf.mxu0
        %676 = vmatprep.mubr.f32.mxu0 0.0
        %677 = vmatmul.mubr.f32.gmra.mxu0 %v577
        %v678 = vpop.f32.mrf.mxu0
        %v679 = vadd.f32 0.0, %v678
        %v680 = vpop.f32.mrf.mxu0
        %681 = vmatprep.mubr.f32.mxu0 0.0
        %682 = vmatmul.mubr.f32.gmra.mxu0 %v580
        %v683 = vpop.f32.mrf.mxu0
        %v684 = vadd.f32 0.0, %v683
        %v685 = vpop.f32.mrf.mxu0
        %686 = vmatprep.mubr.f32.mxu0 0.0
        %687 = vmatmul.mubr.f32.gmra.mxu0 %v583
        %v688 = vpop.f32.mrf.mxu0
        %v689 = vadd.f32 0.0, %v688
        %v690 = vpop.f32.mrf.mxu0
        %691 = vmatprep.mubr.f32.mxu0 0.0
        %692 = vmatmul.mubr.f32.gmra.mxu0 %v586
        %v693 = vpop.f32.mrf.mxu0
        %v694 = vadd.f32 0.0, %v693
        %v695 = vpop.f32.mrf.mxu0
        %696 = vdwg.mxu0
        %v697 = vxor.u32 %v659, 2147483648
        %v698 = vxor.u32 %v664, 2147483648
        %v699 = vxor.u32 %v669, 2147483648
        %v700 = vxor.u32 %v674, 2147483648
        %v701 = vxor.u32 %v679, 2147483648
        %v702 = vxor.u32 %v684, 2147483648
        %v703 = vxor.u32 %v689, 2147483648
        %v704 = vxor.u32 %v694, 2147483648
        %v705 = vmul.f32 %v697, 1.442695
        %v706 = vpow.pop %v705
        %v707 = vmul.f32 %v698, 1.442695
        %v708 = vpow.pop %v707
        %v709 = vmul.f32 %v699, 1.442695
        %v710 = vpow.pop %v709
        %v711 = vmul.f32 %v700, 1.442695
        %v712 = vpow.pop %v711
        %v713 = vmul.f32 %v701, 1.442695
        %v714 = vpow.pop %v713
        %v715 = vmul.f32 %v702, 1.442695
        %v716 = vpow.pop %v715
        %v717 = vmul.f32 %v703, 1.442695
        %v718 = vpow.pop %v717
        %v719 = vmul.f32 %v704, 1.442695
        %v720 = vpow.pop %v719
        %v721 = vadd.f32 %v706, 1.0
        %v722 = vadd.f32 %v708, 1.0
        %v723 = vadd.f32 %v710, 1.0
        %v724 = vadd.f32 %v712, 1.0
        %v725 = vadd.f32 %v714, 1.0
        %v726 = vadd.f32 %v716, 1.0
        %v727 = vadd.f32 %v718, 1.0
        %v728 = vadd.f32 %v720, 1.0
        %v729 = vrcp.pop %v721
        %v730 = vmul.f32 1.0, %v729
        %v731 = vrcp.pop %v722
        %v732 = vmul.f32 1.0, %v731
        %v733 = vrcp.pop %v723
        %v734 = vmul.f32 1.0, %v733
        %v735 = vrcp.pop %v724
        %v736 = vmul.f32 1.0, %v735
        %v737 = vrcp.pop %v725
        %v738 = vmul.f32 1.0, %v737
        %v739 = vrcp.pop %v726
        %v740 = vmul.f32 1.0, %v739
        %v741 = vrcp.pop %v727
        %v742 = vmul.f32 1.0, %v741
        %v743 = vrcp.pop %v728
        %v744 = vmul.f32 1.0, %v743
        %745 = vrot.lane.b32.xlu0 %v562, 112
        %v746 = vpop.permute.xlu0 %745
        %v748 = vsel %vm563, %v467, 0
        %v751 = vsel %vm563, %v468, 0
        %v754 = vsel %vm563, %v469, 0
        %v757 = vsel %vm563, %v470, 0
        %v760 = vsel %vm563, %v471, 0
        %v763 = vsel %vm563, %v472, 0
        %v766 = vsel %vm563, %v473, 0
        %v769 = vsel %vm563, %v474, 0
        %v771 = vsel %vm588, %v746, 0
        %773 = vmatprep.subr.mxu0 0.0
        %774 = vmatpush1.msra.mxu0 0.0
        %775 = vmatprep.subr.mxu0 0.0
        %776 = vmatpush1.msra.mxu0 0.0
        %777 = vmatprep.subr.mxu0 0.0
        %778 = vmatpush1.msra.mxu0 0.0
        %779 = vmatprep.subr.mxu0 0.0
        %780 = vmatpush1.msra.mxu0 0.0
        %781 = vmatprep.subr.mxu0 0.0
        %782 = vmatpush1.msra.mxu0 0.0
        %783 = vmatprep.subr.mxu0 0.0
        %784 = vmatpush1.msra.mxu0 0.0
        %785 = vmatprep.subr.mxu0 0.0
        %786 = vmatpush1.msra.mxu0 0.0
        %787 = vmatprep.subr.mxu0 0.0
        %788 = vmatpush1.msra.mxu0 0.0
        %789 = vmatprep.subr.mxu0 0.0
        %790 = vmatpush1.msra.mxu0 0.0
        %791 = vmatprep.subr.mxu0 0.0
        %792 = vmatpush1.msra.mxu0 0.0
        %793 = vmatprep.subr.mxu0 0.0
        %794 = vmatpush1.msra.mxu0 0.0
        %795 = vmatprep.subr.mxu0 0.0
        %796 = vmatpush1.msra.mxu0 0.0
        %797 = vmatprep.subr.mxu0 0.0
        %798 = vmatpush1.msra.mxu0 0.0
        %799 = vmatprep.subr.mxu0 0.0
        %800 = vmatpush1.msra.mxu0 0.0
        %801 = vmatprep.subr.mxu0 0.0
        %802 = vmatpush1.msra.mxu0 0.0
        %803 = vmatprep.subr.mxu0 0.0
        %804 = vmatpush1.msra.mxu0 %v771
        %805 = vmatprep.subr.mxu0 0.0
        %806 = vmatpush2.msra.mxu0 0.0
        %807 = vmatprep.subr.mxu0 0.0
        %808 = vmatpush2.msra.mxu0 0.0
        %809 = vmatprep.subr.mxu0 0.0
        %810 = vmatpush2.msra.mxu0 0.0
        %811 = vmatprep.subr.mxu0 0.0
        %812 = vmatpush2.msra.mxu0 0.0
        %813 = vmatprep.subr.mxu0 0.0
        %814 = vmatpush2.msra.mxu0 0.0
        %815 = vmatprep.subr.mxu0 0.0
        %816 = vmatpush2.msra.mxu0 0.0
        %817 = vmatprep.subr.mxu0 0.0
        %818 = vmatpush2.msra.mxu0 0.0
        %819 = vmatprep.subr.mxu0 0.0
        %820 = vmatpush2.msra.mxu0 0.0
        %821 = vmatprep.subr.mxu0 0.0
        %822 = vmatpush2.msra.mxu0 0.0
        %823 = vmatprep.subr.mxu0 0.0
        %824 = vmatpush2.msra.mxu0 0.0
        %825 = vmatprep.subr.mxu0 0.0
        %826 = vmatpush2.msra.mxu0 0.0
        %827 = vmatprep.subr.mxu0 0.0
        %828 = vmatpush2.msra.mxu0 0.0
        %829 = vmatprep.subr.mxu0 0.0
        %830 = vmatpush2.msra.mxu0 0.0
        %831 = vmatprep.subr.mxu0 0.0
        %832 = vmatpush2.msra.mxu0 0.0
        %833 = vmatprep.subr.mxu0 0.0
        %834 = vmatpush2.msra.mxu0 0.0
        %835 = vmatprep.subr.mxu0 0.0
        %836 = vmatpush2.msra.mxu0 0.0
        %837 = vmatprep.mubr.f32.mxu0 0.0
        %838 = vmatmul.mubr.f32.gmra.mxu0 %v748
        %v839 = vpop.f32.mrf.mxu0
        %v840 = vadd.f32 0.0, %v839
        %v841 = vpop.f32.mrf.mxu0
        %842 = vmatprep.mubr.f32.mxu0 0.0
        %843 = vmatmul.mubr.f32.gmra.mxu0 %v751
        %v844 = vpop.f32.mrf.mxu0
        %v845 = vadd.f32 0.0, %v844
        %v846 = vpop.f32.mrf.mxu0
        %847 = vmatprep.mubr.f32.mxu0 0.0
        %848 = vmatmul.mubr.f32.gmra.mxu0 %v754
        %v849 = vpop.f32.mrf.mxu0
        %v850 = vadd.f32 0.0, %v849
        %v851 = vpop.f32.mrf.mxu0
        %852 = vmatprep.mubr.f32.mxu0 0.0
        %853 = vmatmul.mubr.f32.gmra.mxu0 %v757
        %v854 = vpop.f32.mrf.mxu0
        %v855 = vadd.f32 0.0, %v854
        %v856 = vpop.f32.mrf.mxu0
        %857 = vmatprep.mubr.f32.mxu0 0.0
        %858 = vmatmul.mubr.f32.gmra.mxu0 %v760
        %v859 = vpop.f32.mrf.mxu0
        %v860 = vadd.f32 0.0, %v859
        %v861 = vpop.f32.mrf.mxu0
        %862 = vmatprep.mubr.f32.mxu0 0.0
        %863 = vmatmul.mubr.f32.gmra.mxu0 %v763
        %v864 = vpop.f32.mrf.mxu0
        %v865 = vadd.f32 0.0, %v864
        %v866 = vpop.f32.mrf.mxu0
        %867 = vmatprep.mubr.f32.mxu0 0.0
        %868 = vmatmul.mubr.f32.gmra.mxu0 %v766
        %v869 = vpop.f32.mrf.mxu0
        %v870 = vadd.f32 0.0, %v869
        %v871 = vpop.f32.mrf.mxu0
        %872 = vmatprep.mubr.f32.mxu0 0.0
        %873 = vmatmul.mubr.f32.gmra.mxu0 %v769
        %v874 = vpop.f32.mrf.mxu0
        %v875 = vadd.f32 0.0, %v874
        %v876 = vpop.f32.mrf.mxu0
        %877 = vdwg.mxu0
        %v878 = vxor.u32 %v840, 2147483648
        %v879 = vxor.u32 %v845, 2147483648
        %v880 = vxor.u32 %v850, 2147483648
        %v881 = vxor.u32 %v855, 2147483648
        %v882 = vxor.u32 %v860, 2147483648
        %v883 = vxor.u32 %v865, 2147483648
        %v884 = vxor.u32 %v870, 2147483648
        %v885 = vxor.u32 %v875, 2147483648
        %v886 = vmul.f32 %v878, 1.442695
        %v887 = vpow.pop %v886
        %v888 = vmul.f32 %v879, 1.442695
        %v889 = vpow.pop %v888
        %v890 = vmul.f32 %v880, 1.442695
        %v891 = vpow.pop %v890
        %v892 = vmul.f32 %v881, 1.442695
        %v893 = vpow.pop %v892
        %v894 = vmul.f32 %v882, 1.442695
        %v895 = vpow.pop %v894
        %v896 = vmul.f32 %v883, 1.442695
        %v897 = vpow.pop %v896
        %v898 = vmul.f32 %v884, 1.442695
        %v899 = vpow.pop %v898
        %v900 = vmul.f32 %v885, 1.442695
        %v901 = vpow.pop %v900
        %v902 = vadd.f32 %v887, 1.0
        %v903 = vadd.f32 %v889, 1.0
        %v904 = vadd.f32 %v891, 1.0
        %v905 = vadd.f32 %v893, 1.0
        %v906 = vadd.f32 %v895, 1.0
        %v907 = vadd.f32 %v897, 1.0
        %v908 = vadd.f32 %v899, 1.0
        %v909 = vadd.f32 %v901, 1.0
        %v910 = vrcp.pop %v902
        %v911 = vmul.f32 1.0, %v910
        %v912 = vrcp.pop %v903
        %v913 = vmul.f32 1.0, %v912
        %v914 = vrcp.pop %v904
        %v915 = vmul.f32 1.0, %v914
        %v916 = vrcp.pop %v905
        %v917 = vmul.f32 1.0, %v916
        %v918 = vrcp.pop %v906
        %v919 = vmul.f32 1.0, %v918
        %v920 = vrcp.pop %v907
        %v921 = vmul.f32 1.0, %v920
        %v922 = vrcp.pop %v908
        %v923 = vmul.f32 1.0, %v922
        %v924 = vrcp.pop %v909
        %v925 = vmul.f32 1.0, %v924
        %vm926 = vcmask 130048
        %v928 = vsel %vm926, %v730, 0
        %v931 = vsel %vm926, %v732, 0
        %v934 = vsel %vm926, %v734, 0
        %v937 = vsel %vm926, %v736, 0
        %v940 = vsel %vm926, %v738, 0
        %v943 = vsel %vm926, %v740, 0
        %v946 = vsel %vm926, %v742, 0
        %v949 = vsel %vm926, %v744, 0
        %951 = vmatprep.subr.mxu0 0.0
        %952 = vmatpush1.msra.mxu0 0.0
        %953 = vmatprep.subr.mxu0 0.0
        %954 = vmatpush1.msra.mxu0 0.0
        %955 = vmatprep.subr.mxu0 0.0
        %956 = vmatpush1.msra.mxu0 0.0
        %957 = vmatprep.subr.mxu0 0.0
        %958 = vmatpush1.msra.mxu0 0.0
        %959 = vmatprep.subr.mxu0 0.0
        %960 = vmatpush1.msra.mxu0 0.0
        %961 = vmatprep.subr.mxu0 0.0
        %962 = vmatpush1.msra.mxu0 0.0
        %963 = vmatprep.subr.mxu0 0.0
        %964 = vmatpush1.msra.mxu0 0.0
        %965 = vmatprep.subr.mxu0 0.0
        %966 = vmatpush1.msra.mxu0 0.0
        %967 = vmatprep.subr.mxu0 0.0
        %968 = vmatpush1.msra.mxu0 0.0
        %969 = vmatprep.subr.mxu0 0.0
        %970 = vmatpush1.msra.mxu0 0.0
        %971 = vmatprep.subr.mxu0 0.0
        %972 = vmatpush1.msra.mxu0 0.0
        %973 = vmatprep.subr.mxu0 0.0
        %974 = vmatpush1.msra.mxu0 0.0
        %975 = vmatprep.subr.mxu0 0.0
        %976 = vmatpush1.msra.mxu0 0.0
        %977 = vmatprep.subr.mxu0 0.0
        %978 = vmatpush1.msra.mxu0 0.0
        %979 = vmatprep.subr.mxu0 %v478
        %980 = vmatpush1.msra.mxu0 %v477
        %981 = vmatprep.subr.mxu0 %v476
        %982 = vmatpush1.msra.mxu0 %v475
        %983 = vmatprep.subr.mxu0 0.0
        %984 = vmatpush2.msra.mxu0 0.0
        %985 = vmatprep.subr.mxu0 0.0
        %986 = vmatpush2.msra.mxu0 0.0
        %987 = vmatprep.subr.mxu0 0.0
        %988 = vmatpush2.msra.mxu0 0.0
        %989 = vmatprep.subr.mxu0 0.0
        %990 = vmatpush2.msra.mxu0 0.0
        %991 = vmatprep.subr.mxu0 0.0
        %992 = vmatpush2.msra.mxu0 0.0
        %993 = vmatprep.subr.mxu0 0.0
        %994 = vmatpush2.msra.mxu0 0.0
        %995 = vmatprep.subr.mxu0 0.0
        %996 = vmatpush2.msra.mxu0 0.0
        %997 = vmatprep.subr.mxu0 0.0
        %998 = vmatpush2.msra.mxu0 0.0
        %999 = vmatprep.subr.mxu0 0.0
        %1000 = vmatpush2.msra.mxu0 0.0
        %1001 = vmatprep.subr.mxu0 0.0
        %1002 = vmatpush2.msra.mxu0 0.0
        %1003 = vmatprep.subr.mxu0 0.0
        %1004 = vmatpush2.msra.mxu0 0.0
        %1005 = vmatprep.subr.mxu0 0.0
        %1006 = vmatpush2.msra.mxu0 0.0
        %1007 = vmatprep.subr.mxu0 0.0
        %1008 = vmatpush2.msra.mxu0 0.0
        %1009 = vmatprep.subr.mxu0 0.0
        %1010 = vmatpush2.msra.mxu0 0.0
        %1011 = vmatprep.subr.mxu0 0.0
        %1012 = vmatpush2.msra.mxu0 0.0
        %1013 = vmatprep.subr.mxu0 0.0
        %1014 = vmatpush2.msra.mxu0 0.0
        %1015 = vmatprep.mubr.f32.mxu0 0.0
        %1016 = vmatmul.mubr.f32.gmra.mxu0 %v928
        %v1017 = vpop.f32.mrf.mxu0
        %v1018 = vadd.f32 0.0, %v1017
        %v1019 = vpop.f32.mrf.mxu0
        %v1020 = vadd.f32 0.0, %v1019
        %1021 = vmatprep.mubr.f32.mxu0 0.0
        %1022 = vmatmul.mubr.f32.gmra.mxu0 %v931
        %v1023 = vpop.f32.mrf.mxu0
        %v1024 = vadd.f32 0.0, %v1023
        %v1025 = vpop.f32.mrf.mxu0
        %v1026 = vadd.f32 0.0, %v1025
        %1027 = vmatprep.mubr.f32.mxu0 0.0
        %1028 = vmatmul.mubr.f32.gmra.mxu0 %v934
        %v1029 = vpop.f32.mrf.mxu0
        %v1030 = vadd.f32 0.0, %v1029
        %v1031 = vpop.f32.mrf.mxu0
        %v1032 = vadd.f32 0.0, %v1031
        %1033 = vmatprep.mubr.f32.mxu0 0.0
        %1034 = vmatmul.mubr.f32.gmra.mxu0 %v937
        %v1035 = vpop.f32.mrf.mxu0
        %v1036 = vadd.f32 0.0, %v1035
        %v1037 = vpop.f32.mrf.mxu0
        %v1038 = vadd.f32 0.0, %v1037
        %1039 = vmatprep.mubr.f32.mxu0 0.0
        %1040 = vmatmul.mubr.f32.gmra.mxu0 %v940
        %v1041 = vpop.f32.mrf.mxu0
        %v1042 = vadd.f32 0.0, %v1041
        %v1043 = vpop.f32.mrf.mxu0
        %v1044 = vadd.f32 0.0, %v1043
        %1045 = vmatprep.mubr.f32.mxu0 0.0
        %1046 = vmatmul.mubr.f32.gmra.mxu0 %v943
        %v1047 = vpop.f32.mrf.mxu0
        %v1048 = vadd.f32 0.0, %v1047
        %v1049 = vpop.f32.mrf.mxu0
        %v1050 = vadd.f32 0.0, %v1049
        %1051 = vmatprep.mubr.f32.mxu0 0.0
        %1052 = vmatmul.mubr.f32.gmra.mxu0 %v946
        %v1053 = vpop.f32.mrf.mxu0
        %v1054 = vadd.f32 0.0, %v1053
        %v1055 = vpop.f32.mrf.mxu0
        %v1056 = vadd.f32 0.0, %v1055
        %1057 = vmatprep.mubr.f32.mxu0 0.0
        %1058 = vmatmul.mubr.f32.gmra.mxu0 %v949
        %v1059 = vpop.f32.mrf.mxu0
        %v1060 = vadd.f32 0.0, %v1059
        %v1061 = vpop.f32.mrf.mxu0
        %v1062 = vadd.f32 0.0, %v1061
        %1063 = vdwg.mxu0
        %v1065 = vsel %vm926, %v911, 0
        %v1068 = vsel %vm926, %v913, 0
        %v1071 = vsel %vm926, %v915, 0
        %v1074 = vsel %vm926, %v917, 0
        %v1077 = vsel %vm926, %v919, 0
        %v1080 = vsel %vm926, %v921, 0
        %v1083 = vsel %vm926, %v923, 0
        %v1086 = vsel %vm926, %v925, 0
        %1088 = vmatprep.subr.mxu0 0.0
        %1089 = vmatpush1.msra.mxu0 0.0
        %1090 = vmatprep.subr.mxu0 0.0
        %1091 = vmatpush1.msra.mxu0 0.0
        %1092 = vmatprep.subr.mxu0 0.0
        %1093 = vmatpush1.msra.mxu0 0.0
        %1094 = vmatprep.subr.mxu0 0.0
        %1095 = vmatpush1.msra.mxu0 0.0
        %1096 = vmatprep.subr.mxu0 0.0
        %1097 = vmatpush1.msra.mxu0 0.0
        %1098 = vmatprep.subr.mxu0 0.0
        %1099 = vmatpush1.msra.mxu0 0.0
        %1100 = vmatprep.subr.mxu0 0.0
        %1101 = vmatpush1.msra.mxu0 0.0
        %1102 = vmatprep.subr.mxu0 0.0
        %1103 = vmatpush1.msra.mxu0 0.0
        %1104 = vmatprep.subr.mxu0 0.0
        %1105 = vmatpush1.msra.mxu0 0.0
        %1106 = vmatprep.subr.mxu0 0.0
        %1107 = vmatpush1.msra.mxu0 0.0
        %1108 = vmatprep.subr.mxu0 0.0
        %1109 = vmatpush1.msra.mxu0 0.0
        %1110 = vmatprep.subr.mxu0 0.0
        %1111 = vmatpush1.msra.mxu0 0.0
        %1112 = vmatprep.subr.mxu0 0.0
        %1113 = vmatpush1.msra.mxu0 0.0
        %1114 = vmatprep.subr.mxu0 0.0
        %1115 = vmatpush1.msra.mxu0 0.0
        %1116 = vmatprep.subr.mxu0 %v482
        %1117 = vmatpush1.msra.mxu0 %v481
        %1118 = vmatprep.subr.mxu0 %v480
        %1119 = vmatpush1.msra.mxu0 %v479
        %1120 = vmatprep.subr.mxu0 0.0
        %1121 = vmatpush2.msra.mxu0 0.0
        %1122 = vmatprep.subr.mxu0 0.0
        %1123 = vmatpush2.msra.mxu0 0.0
        %1124 = vmatprep.subr.mxu0 0.0
        %1125 = vmatpush2.msra.mxu0 0.0
        %1126 = vmatprep.subr.mxu0 0.0
        %1127 = vmatpush2.msra.mxu0 0.0
        %1128 = vmatprep.subr.mxu0 0.0
        %1129 = vmatpush2.msra.mxu0 0.0
        %1130 = vmatprep.subr.mxu0 0.0
        %1131 = vmatpush2.msra.mxu0 0.0
        %1132 = vmatprep.subr.mxu0 0.0
        %1133 = vmatpush2.msra.mxu0 0.0
        %1134 = vmatprep.subr.mxu0 0.0
        %1135 = vmatpush2.msra.mxu0 0.0
        %1136 = vmatprep.subr.mxu0 0.0
        %1137 = vmatpush2.msra.mxu0 0.0
        %1138 = vmatprep.subr.mxu0 0.0
        %1139 = vmatpush2.msra.mxu0 0.0
        %1140 = vmatprep.subr.mxu0 0.0
        %1141 = vmatpush2.msra.mxu0 0.0
        %1142 = vmatprep.subr.mxu0 0.0
        %1143 = vmatpush2.msra.mxu0 0.0
        %1144 = vmatprep.subr.mxu0 0.0
        %1145 = vmatpush2.msra.mxu0 0.0
        %1146 = vmatprep.subr.mxu0 0.0
        %1147 = vmatpush2.msra.mxu0 0.0
        %1148 = vmatprep.subr.mxu0 0.0
        %1149 = vmatpush2.msra.mxu0 0.0
        %1150 = vmatprep.subr.mxu0 0.0
        %1151 = vmatpush2.msra.mxu0 0.0
        %1152 = vmatprep.mubr.f32.mxu0 0.0
        %1153 = vmatmul.mubr.f32.gmra.mxu0 %v1065
        %v1154 = vpop.f32.mrf.mxu0
        %v1155 = vadd.f32 0.0, %v1154
        %v1156 = vpop.f32.mrf.mxu0
        %v1157 = vadd.f32 0.0, %v1156
        %1158 = vmatprep.mubr.f32.mxu0 0.0
        %1159 = vmatmul.mubr.f32.gmra.mxu0 %v1068
        %v1160 = vpop.f32.mrf.mxu0
        %v1161 = vadd.f32 0.0, %v1160
        %v1162 = vpop.f32.mrf.mxu0
        %v1163 = vadd.f32 0.0, %v1162
        %1164 = vmatprep.mubr.f32.mxu0 0.0
        %1165 = vmatmul.mubr.f32.gmra.mxu0 %v1071
        %v1166 = vpop.f32.mrf.mxu0
        %v1167 = vadd.f32 0.0, %v1166
        %v1168 = vpop.f32.mrf.mxu0
        %v1169 = vadd.f32 0.0, %v1168
        %1170 = vmatprep.mubr.f32.mxu0 0.0
        %1171 = vmatmul.mubr.f32.gmra.mxu0 %v1074
        %v1172 = vpop.f32.mrf.mxu0
        %v1173 = vadd.f32 0.0, %v1172
        %v1174 = vpop.f32.mrf.mxu0
        %v1175 = vadd.f32 0.0, %v1174
        %1176 = vmatprep.mubr.f32.mxu0 0.0
        %1177 = vmatmul.mubr.f32.gmra.mxu0 %v1077
        %v1178 = vpop.f32.mrf.mxu0
        %v1179 = vadd.f32 0.0, %v1178
        %v1180 = vpop.f32.mrf.mxu0
        %v1181 = vadd.f32 0.0, %v1180
        %1182 = vmatprep.mubr.f32.mxu0 0.0
        %1183 = vmatmul.mubr.f32.gmra.mxu0 %v1080
        %v1184 = vpop.f32.mrf.mxu0
        %v1185 = vadd.f32 0.0, %v1184
        %v1186 = vpop.f32.mrf.mxu0
        %v1187 = vadd.f32 0.0, %v1186
        %1188 = vmatprep.mubr.f32.mxu0 0.0
        %1189 = vmatmul.mubr.f32.gmra.mxu0 %v1083
        %v1190 = vpop.f32.mrf.mxu0
        %v1191 = vadd.f32 0.0, %v1190
        %v1192 = vpop.f32.mrf.mxu0
        %v1193 = vadd.f32 0.0, %v1192
        %1194 = vmatprep.mubr.f32.mxu0 0.0
        %1195 = vmatmul.mubr.f32.gmra.mxu0 %v1086
        %v1196 = vpop.f32.mrf.mxu0
        %v1197 = vadd.f32 0.0, %v1196
        %v1198 = vpop.f32.mrf.mxu0
        %v1199 = vadd.f32 0.0, %v1198
        %1200 = vdwg.mxu0
        %v1201 = vmul.f32 %v304, %v1018
        %v1202 = vmul.f32 %v305, %v1020
        %v1203 = vmul.f32 %v306, %v1024
        %v1204 = vmul.f32 %v307, %v1026
        %v1205 = vmul.f32 %v308, %v1030
        %v1206 = vmul.f32 %v309, %v1032
        %v1207 = vmul.f32 %v310, %v1036
        %v1208 = vmul.f32 %v311, %v1038
        %v1209 = vmul.f32 %v312, %v1042
        %v1210 = vmul.f32 %v313, %v1044
        %v1211 = vmul.f32 %v314, %v1048
        %v1212 = vmul.f32 %v315, %v1050
        %v1213 = vmul.f32 %v316, %v1054
        %v1214 = vmul.f32 %v317, %v1056
        %v1215 = vmul.f32 %v318, %v1060
        %v1216 = vmul.f32 %v319, %v1062
        %v1217 = vmul.f32 %v1201, %v1155
        %v1218 = vmul.f32 %v1202, %v1157
        %v1219 = vmul.f32 %v1203, %v1161
        %v1220 = vmul.f32 %v1204, %v1163
        %v1221 = vmul.f32 %v1205, %v1167
        %v1222 = vmul.f32 %v1206, %v1169
        %v1223 = vmul.f32 %v1207, %v1173
        %v1224 = vmul.f32 %v1208, %v1175
        %v1225 = vmul.f32 %v1209, %v1179
        %v1226 = vmul.f32 %v1210, %v1181
        %v1227 = vmul.f32 %v1211, %v1185
        %v1228 = vmul.f32 %v1212, %v1187
        %v1229 = vmul.f32 %v1213, %v1191
        %v1230 = vmul.f32 %v1214, %v1193
        %v1231 = vmul.f32 %v1215, %v1197
        %v1232 = vmul.f32 %v1216, %v1199
        %1233 = vst [vmem:[%s298] sm:$0xff] %v1217
        %1234 = vst [vmem:[%s298 + $0x8] sm:$0xff] %v1218
        %1235 = vst [vmem:[%s298 + $0x10] sm:$0xff] %v1219
        %1236 = vst [vmem:[%s298 + $0x18] sm:$0xff] %v1220
        %1237 = vst [vmem:[%s298 + $0x20] sm:$0xff] %v1221
        %1238 = vst [vmem:[%s298 + $0x28] sm:$0xff] %v1222
        %1239 = vst [vmem:[%s298 + $0x30] sm:$0xff] %v1223
        %1240 = vst [vmem:[%s298 + $0x38] sm:$0xff] %v1224
        %1241 = vst [vmem:[%s298 + $0x40] sm:$0xff] %v1225
        %1242 = vst [vmem:[%s298 + $0x48] sm:$0xff] %v1226
        %1243 = vst [vmem:[%s298 + $0x50] sm:$0xff] %v1227
        %1244 = vst [vmem:[%s298 + $0x58] sm:$0xff] %v1228
        %1245 = vst [vmem:[%s298 + $0x60] sm:$0xff] %v1229
        %1246 = vst [vmem:[%s298 + $0x68] sm:$0xff] %v1230
        %1247 = vst [vmem:[%s298 + $0x70] sm:$0xff] %v1231
        %1248 = vst [vmem:[%s298 + $0x78] sm:$0xff] %v1232
        %s1249 = sand.u32 %s203, 1
        %s1250 = scalar_lea.sflag [#allocation3], %s1249
        %s1251 = sand.u32 %s203, 1
        %s1252 = smul.addr %s1251, 128
        %s1253 = scalar_lea.vmem [#allocation2], %s1252
        // Predicated region
        $region53: #{tpu_custom_call.1} parent=51 // pred_check
          %p1254 = pneg %p213
        $region54: #{tpu_custom_call.1} parent=51 // pred_check_branch
          %1256 = sbr.rel (%p1254) target = $region56
        $region55: #{tpu_custom_call.1} parent=51 // pred_region
          %s1258 = ssub.s32 2048, 2048
          %1259 = vsyncadd %s1250, %s1258
          %s1260 = smul.addr %s22, 16
          %s1261 = smul.addr %s1260, 128
          %s1262 = scalar_lea.hbm %s8, %s1261
          %s1263 = sshll.u32 %s1253, 4
          %s1264 = int_to_ptr.vmem [resolvable:$true] %s1263
          %1269 = dma.vmem_to_hbm [thread:$0]  %s1264, 2048, %s1262, %s1250, 256, 256, 16
        $region56: #{tpu_custom_call.1} parent=51 // pred_fallthru
          _
      $region52: #{tpu_custom_call.1} parent=5 // pred_fallthru
        _
      %p1270 = scmp.le.s32.totalorder 2, %s17
      // Predicated region
      $region57: #{tpu_custom_call.1} parent=5 // pred_check
        %p1271 = pneg %p1270
      $region58: #{tpu_custom_call.1} parent=5 // pred_check_branch
        %1273 = sbr.rel (%p1271) target = $region60
      $region59: #{tpu_custom_call.1} parent=5 // pred_region
        %s1274 = ssub.s32 %s17, 2
        // Predicated region
        $region61: #{tpu_custom_call.1} parent=59 // pred_check
          %p1275 = pneg %p219
        $region62: #{tpu_custom_call.1} parent=59 // pred_check_branch
          %1277 = sbr.rel (%p1275) target = $region64
        $region63: #{tpu_custom_call.1} parent=59 // pred_region
          %s1278 = sand.u32 %s204, 1
          %s1279 = scalar_lea.sflag [#allocation3], %s1278
          %s1280 = sand.u32 %s204, 1
          %s1281 = smul.addr %s1280, 128
          %s1282 = scalar_lea.vmem [#allocation2], %s1281
          %1283 = dma.done %s1279, 2048
        $region64: #{tpu_custom_call.1} parent=59 // pred_fallthru
          _
      $region60: #{tpu_custom_call.1} parent=5 // pred_fallthru
        _
    $region6: #{tpu_custom_call.1} parent=1 // loop_footer
      %s21 = sadd.s32 1, %s17
    $region7: #{tpu_custom_call.1} parent=1 // loop_footer_branch
      %16 = sbr.rel target = $region3
    $region8: #{tpu_custom_call.1} parent=1 // loop_exit
      _
    %1284 = vsyncpa [#allocation3], 1
    %s1285 = scalar_lea.sflag [#allocation3], 1
    %1286 = vsyncpa %s1285, 1

</llo_original>
